<compile_context>
chip_gen: v7x
topology: tpu7x:2x2x1
jax: 0.10.0
libtpu: 0.0.40
codegen_flags: <defaults>
</compile_context>

<pallas_src>
import jax
import jax.numpy as jnp
from jax.experimental import pallas as pl
from jax.experimental.pallas import tpu as pltpu

_LN_EPS = 1e-5  # torch.nn.LayerNorm default


# ----------------------------------------------------------------------------
# small helpers
# ----------------------------------------------------------------------------
def _cdiv(a, b):
    return -(-a // b)


def _round_up(x, m):
    return _cdiv(x, m) * m


def _sublane(dtype):
    return 16 if jnp.dtype(dtype).itemsize == 2 else 8


def _vmem_budget():
    """vmem_limit_bytes ~= 85% of physical VMEM (v5e/v6e 128 MiB, v7x 64 MiB)."""
    cap = 64 * 1024 * 1024  # conservative fallback = v7x physical
    try:
        info = pltpu.get_tpu_info()
        c = int(getattr(info, "vmem_capacity_bytes", 0) or 0)
        if c > 0:
            cap = c
    except Exception:
        pass
    return int(cap * 0.85)


def _row_candidates(R, act_dtype):
    """Descending row-tile candidates; capped so >=2 row tiles (dual-TC)."""
    sub = _sublane(act_dtype)
    half = _round_up(max(_cdiv(R, 2), 1), sub)
    tile_cap = max(sub, min(1024, half))
    cands = {t for t in (1024, 512, 256, 128, 64, 32, 16, 8, tile_cap)
             if t <= tile_cap and t % sub == 0}
    return sorted(cands, reverse=True)


def _pick_adapter_tiles(R, H, H2, act_dtype, w_dtype, budget, fuse):
    """(tile_rows, kc) maximizing tile_rows under the VMEM footprint budget."""
    ab = jnp.dtype(act_dtype).itemsize
    wb = jnp.dtype(w_dtype).itemsize
    row_cands = _row_candidates(R, act_dtype)
    kc_cands = sorted({c for c in (1024, 512, 256, 128) if c < H2} | {H2},
                      reverse=True)

    def footprint(t, kc):
        f = 2 * t * H * ab          # x blocks (double buffered)
        f += 2 * t * H * ab         # out blocks
        f += t * H * 4              # f32 accumulator scratch
        f += t * H * ab             # cached LayerNorm scratch
        f += 4 * H * kc * wb        # w1 + w2 chunks, double buffered
        f += 8 * max(H, kc) * 4     # biases / gamma / beta (generous)
        if fuse:
            f += 2 * H * H * wb     # resident zero_linear weight
            f += 2 * t * H * ab     # second output blocks
        return f

    for t in row_cands:
        for kc in kc_cands:
            if footprint(t, kc) <= budget:
                return t, kc
    return None


def _pick_linear_tiles(R, K, N, act_dtype, w_dtype, budget):
    ab = jnp.dtype(act_dtype).itemsize
    wb = jnp.dtype(w_dtype).itemsize
    row_cands = _row_candidates(R, act_dtype)
    kc_cands = sorted({c for c in (1024, 512, 256, 128) if c < K} | {K},
                      reverse=True)

    def footprint(t, kc):
        return (2 * t * kc * ab + 2 * kc * N * wb + 2 * t * N * ab
                + t * N * 4 + 2 * N * 4)

    for t in row_cands:
        for kc in kc_cands:
            if footprint(t, kc) <= budget:
                return t, kc
    return _sublane(act_dtype), min(128, K)


# ----------------------------------------------------------------------------
# Kernel 1: generic linear  y = x @ W + b
#   (patch-embed conv-as-matmul, text_proj, fallback zero_linears)
# ----------------------------------------------------------------------------
def _linear_kernel_single(x_ref, w_ref, b_ref, o_ref):
    acc = jnp.dot(x_ref[...], w_ref[...], preferred_element_type=jnp.float32)
    o_ref[...] = (acc + b_ref[...].astype(jnp.float32)).astype(o_ref.dtype)


def _linear_kernel_acc(x_ref, w_ref, b_ref, o_ref, acc_ref):
    k = pl.program_id(1)

    @pl.when(k == 0)
    def _():
        acc_ref[...] = jnp.zeros_like(acc_ref)

    acc_ref[...] += jnp.dot(x_ref[...], w_ref[...],
                            preferred_element_type=jnp.float32)

    @pl.when(k == pl.num_programs(1) - 1)
    def _():
        o_ref[...] = (acc_ref[...] +
                      b_ref[...].astype(jnp.float32)).astype(o_ref.dtype)


def pallas_linear(x, w, b, *, vmem_limit):
    """x: (R, K), w: (K, N), b: (1, N) -> (R, N) in x.dtype."""
    R, K = x.shape
    N = w.shape[1]
    tile_rows, kc = _pick_linear_tiles(R, K, N, x.dtype, w.dtype,
                                       int(vmem_limit * 0.9))
    Kp = _round_up(K, kc)
    if Kp != K:  # zero-pad the reduction dim (exact)
        x = jnp.pad(x, ((0, 0), (0, Kp - K)))
        w = jnp.pad(w, ((0, Kp - K), (0, 0)))
    nrow = _cdiv(R, tile_rows)
    nk = Kp // kc

    cost = pl.CostEstimate(
        flops=int(2 * R * Kp * N), transcendentals=0,
        bytes_accessed=int(R * Kp * x.dtype.itemsize
                           + nrow * Kp * N * w.dtype.itemsize
                           + R * N * x.dtype.itemsize))

    if nk == 1:
        return pl.pallas_call(
            _linear_kernel_single,
            out_shape=jax.ShapeDtypeStruct((R, N), x.dtype),
            grid_spec=pltpu.PrefetchScalarGridSpec(
                num_scalar_prefetch=0,
                grid=(nrow,),
                in_specs=[
                    pl.BlockSpec((tile_rows, kc), lambda i: (i, 0)),
                    pl.BlockSpec((kc, N), lambda i: (0, 0)),
                    pl.BlockSpec((1, N), lambda i: (0, 0)),
                ],
                out_specs=pl.BlockSpec((tile_rows, N), lambda i: (i, 0)),
            ),
            compiler_params=pltpu.CompilerParams(
                dimension_semantics=("parallel",),
                vmem_limit_bytes=vmem_limit),
            cost_estimate=cost,
        )(x, w, b)

    return pl.pallas_call(
        _linear_kernel_acc,
        out_shape=jax.ShapeDtypeStruct((R, N), x.dtype),
        grid_spec=pltpu.PrefetchScalarGridSpec(
            num_scalar_prefetch=0,
            grid=(nrow, nk),
            in_specs=[
                pl.BlockSpec((tile_rows, kc), lambda i, k: (i, k)),
                pl.BlockSpec((kc, N), lambda i, k: (k, 0)),
                pl.BlockSpec((1, N), lambda i, k: (0, 0)),
            ],
            out_specs=pl.BlockSpec((tile_rows, N), lambda i, k: (i, 0)),
            scratch_shapes=[pltpu.VMEM((tile_rows, N), jnp.float32)],
        ),
        compiler_params=pltpu.CompilerParams(
            dimension_semantics=("parallel", "arbitrary"),
            vmem_limit_bytes=vmem_limit),
        cost_estimate=cost,
    )(x, w, b)


# ----------------------------------------------------------------------------
# Kernel 2: fused adapter block
#   out = Linear2(SiLU(Linear1(LayerNorm(x)))) + x        (residual)
# grid = (row_tiles, h2_chunks): the 2H intermediate dim is a reduction axis,
# streamed in kc-wide chunks; LN is computed once per row tile (cached in
# VMEM) and the 2H->H products accumulate in f32.  Optional fused variant
# additionally emits zero_linear(out) as a second output at finalize.
# ----------------------------------------------------------------------------
def _ln_silu_mlp_step(x_ref, g_ref, be_ref, w1_ref, b1_ref, w2_ref,
                      acc_ref, ln_ref):
    k = pl.program_id(1)

    @pl.when(k == 0)
    def _():
        x = x_ref[...].astype(jnp.float32)
        mean = jnp.mean(x, axis=-1, keepdims=True)
        cen = x - mean
        var = jnp.mean(cen * cen, axis=-1, keepdims=True)      # biased, torch
        ln = cen * jax.lax.rsqrt(var + _LN_EPS)
        ln = ln * g_ref[...].astype(jnp.float32) + be_ref[...].astype(jnp.float32)
        ln_ref[...] = ln.astype(ln_ref.dtype)
        acc_ref[...] = jnp.zeros_like(acc_ref)

    # Linear(H -> 2H) chunk: native dtype into the MXU, f32 accumulate
    h1 = jnp.dot(ln_ref[...], w1_ref[...], preferred_element_type=jnp.float32)
    h1 = h1 + b1_ref[...].astype(jnp.float32)
    h1 = h1 * jax.nn.sigmoid(h1)                                # SiLU on EUP
    # Linear(2H -> H) chunk, f32 accumulation
    acc_ref[...] += jnp.dot(h1.astype(w2_ref.dtype), w2_ref[...],
                            preferred_element_type=jnp.float32)


def _adapter_kernel(x_ref, g_ref, be_ref, w1_ref, b1_ref, w2_ref, b2_ref,
                    o_ref, acc_ref, ln_ref):
    _ln_silu_mlp_step(x_ref, g_ref, be_ref, w1_ref, b1_ref, w2_ref,
                      acc_ref, ln_ref)

    @pl.when(pl.program_id(1) == pl.num_programs(1) - 1)
    def _():
        out = (acc_ref[...] + b2_ref[...].astype(jnp.float32)
               + x_ref[...].astype(jnp.float32))                # residual
        o_ref[...] = out.astype(o_ref.dtype)


def _adapter_zero_kernel(x_ref, g_ref, be_ref, w1_ref, b1_ref, w2_ref, b2_ref,
                         zw_ref, o_ref, z_ref, acc_ref, ln_ref):
    _ln_silu_mlp_step(x_ref, g_ref, be_ref, w1_ref, b1_ref, w2_ref,
                      acc_ref, ln_ref)

    @pl.when(pl.program_id(1) == pl.num_programs(1) - 1)
    def _():
        out = (acc_ref[...] + b2_ref[...].astype(jnp.float32)
               + x_ref[...].astype(jnp.float32))                # residual
        o_ref[...] = out.astype(o_ref.dtype)
        # fused zero_linear (bias=False), done while `out` is VMEM-resident
        z_ref[...] = jnp.dot(out.astype(zw_ref.dtype), zw_ref[...],
                             preferred_element_type=jnp.float32
                             ).astype(z_ref.dtype)


def pallas_adapter_layer(x2d, gamma, beta, w1, b1, w2, b2, zw=None, *,
                         tile_rows, kc, vmem_limit):
    R, H = x2d.shape
    H2 = w1.shape[1]
    H2p = _round_up(H2, kc)
    if H2p != H2:
        # zero-padding the 2H dim is exact: SiLU(0) * zero rows of w2 -> 0
        w1 = jnp.pad(w1, ((0, 0), (0, H2p - H2)))
        b1 = jnp.pad(b1, ((0, 0), (0, H2p - H2)))
        w2 = jnp.pad(w2, ((0, H2p - H2), (0, 0)))
    nrow = _cdiv(R, tile_rows)
    nk = H2p // kc
    fused = zw is not None

    wb = jnp.dtype(w1.dtype).itemsize
    ab = jnp.dtype(x2d.dtype).itemsize
    cost = pl.CostEstimate(
        flops=int(4 * R * H * H2p + (2 * R * H * H if fused else 0)),
        transcendentals=int(R * H2p),
        bytes_accessed=int(R * H * ab * (3 if fused else 2)
                           + nrow * 2 * H * H2p * wb
                           + (H * H * wb if fused else 0)))

    in_specs = [
        pl.BlockSpec((tile_rows, H), lambda i, k: (i, 0)),
        pl.BlockSpec((1, H), lambda i, k: (0, 0)),
        pl.BlockSpec((1, H), lambda i, k: (0, 0)),
        pl.BlockSpec((H, kc), lambda i, k: (0, k)),
        pl.BlockSpec((1, kc), lambda i, k: (0, k)),
        pl.BlockSpec((kc, H), lambda i, k: (k, 0)),
        pl.BlockSpec((1, H), lambda i, k: (0, 0)),
    ]
    args = [x2d, gamma, beta, w1, b1, w2, b2]
    if fused:
        in_specs.append(pl.BlockSpec((H, H), lambda i, k: (0, 0)))  # resident
        args.append(zw)
        kernel = _adapter_zero_kernel
        out_shape = (jax.ShapeDtypeStruct((R, H), x2d.dtype),
                     jax.ShapeDtypeStruct((R, H), x2d.dtype))
        out_specs = (pl.BlockSpec((tile_rows, H), lambda i, k: (i, 0)),
                     pl.BlockSpec((tile_rows, H), lambda i, k: (i, 0)))
    else:
        kernel = _adapter_kernel
        out_shape = jax.ShapeDtypeStruct((R, H), x2d.dtype)
        out_specs = pl.BlockSpec((tile_rows, H), lambda i, k: (i, 0))

    return pl.pallas_call(
        kernel,
        out_shape=out_shape,
        grid_spec=pltpu.PrefetchScalarGridSpec(
            num_scalar_prefetch=0,
            grid=(nrow, nk),
            in_specs=in_specs,
            out_specs=out_specs,
            scratch_shapes=[
                pltpu.VMEM((tile_rows, H), jnp.float32),   # f32 accumulator
                pltpu.VMEM((tile_rows, H), x2d.dtype),     # cached LN(x)
            ],
        ),
        compiler_params=pltpu.CompilerParams(
            dimension_semantics=("parallel", "arbitrary"),
            vmem_limit_bytes=vmem_limit),
        cost_estimate=cost,
    )(*args)


# ----------------------------------------------------------------------------
# Plain-JAX glue
# ----------------------------------------------------------------------------
def _extract_patches(x, p):
    """(B,T,C,H,W) NCHW frames -> (B*T*Hp*Wp, C*p*p) patch rows."""
    B, T, C, H, W = x.shape
    Hp, Wp = H // p, W // p
    x = x.reshape(B, T, C, Hp, p, Wp, p)
    x = x.transpose(0, 1, 3, 5, 2, 4, 6)          # B,T,Hp,Wp,C,ph,pw
    return x.reshape(B * T * Hp * Wp, C * p * p), (Hp, Wp)


def control_mlp_adapter_forward(x, context, params, *,
                                compute_dtype=jnp.bfloat16):
    """Returns list of num_layers tensors, each (B, S, hidden)."""
    B, T, C, H, W = x.shape
    p = params["patch_size"]
    hid = params["hidden_size"]
    cdt = jnp.dtype(compute_dtype)
    vlimit = _vmem_budget()

    # patch_embed.word_embedding_forward (Conv2d stride==kernel -> matmul)
    x = x.astype(cdt)
    patches, (Hp, Wp) = _extract_patches(x, p)
    emb = pallas_linear(patches, params["proj_w"].astype(cdt),
                        params["proj_b"], vmem_limit=vlimit)
    emb = emb.reshape(B, T * Hp * Wp, hid)

    if context is not None:
        Bc, Lc, Dc = context.shape
        text = pallas_linear(context.astype(cdt).reshape(Bc * Lc, Dc),
                             params["text_w"].astype(cdt), params["text_b"],
                             vmem_limit=vlimit)
        text = text.reshape(B, Lc, hid)
        hidden = jnp.concatenate([text, emb], axis=1)
    else:
        hidden = emb

    S = hidden.shape[1]
    R = B * S
    h2d = hidden.reshape(R, hid)

    use_zero = params["use_zero_linears"]
    budget = int(vlimit * 0.9)
    tiles = _pick_adapter_tiles(R, hid, 2 * hid, cdt, cdt, budget,
                                fuse=use_zero)
    fuse_zero = bool(use_zero and tiles is not None)
    if tiles is None:
        tiles = _pick_adapter_tiles(R, hid, 2 * hid, cdt, cdt, budget,
                                    fuse=False)
    if tiles is None:
        tiles = (_sublane(cdt), min(128, 2 * hid))
    tile_rows, kc_adapt = tiles

    results_2d = []
    hiddens_2d = []
    for li, (g, be, w1, b1, w2, b2) in enumerate(params["adapters"]):
        if fuse_zero:
            zw = params["zero_linears"][li].astype(cdt)
            h2d, z2d = pallas_adapter_layer(
                h2d, g, be, w1.astype(cdt), b1, w2.astype(cdt), b2, zw,
                tile_rows=tile_rows, kc=kc_adapt, vmem_limit=vlimit)
            results_2d.append(z2d)
        else:
            h2d = pallas_adapter_layer(
                h2d, g, be, w1.astype(cdt), b1, w2.astype(cdt), b2, None,
                tile_rows=tile_rows, kc=kc_adapt, vmem_limit=vlimit)
            hiddens_2d.append(h2d)

    if use_zero and not fuse_zero:
        # fallback: separate zero_linear pass (bias=False in the torch module)
        zb = params["zero_bias"]
        results_2d = [pallas_linear(h, zw.astype(cdt), zb, vmem_limit=vlimit)
                      for h, zw in zip(hiddens_2d, params["zero_linears"])]
    elif not use_zero:
        results_2d = hiddens_2d

    return [r.reshape(B, S, hid) for r in results_2d]


# ----------------------------------------------------------------------------
# Pure-JAX reference (f32, for correctness check)
# ----------------------------------------------------------------------------
def reference_forward(x, context, params):
    B, T, C, H, W = x.shape
    p = params["patch_size"]
    hid = params["hidden_size"]
    patches, (Hp, Wp) = _extract_patches(x, p)
    emb = (patches @ params["proj_w"] + params["proj_b"]).reshape(
        B, T * Hp * Wp, hid)
    text = context @ params["text_w"] + params["text_b"]
    hidden = jnp.concatenate([text, emb], axis=1)
    outs = []
    for (g, be, w1, b1, w2, b2) in params["adapters"]:
        mean = jnp.mean(hidden, -1, keepdims=True)
        var = jnp.mean((hidden - mean) ** 2, -1, keepdims=True)
        ln = (hidden - mean) / jnp.sqrt(var + _LN_EPS) * g + be
        h1 = ln @ w1 + b1
        h1 = h1 * jax.nn.sigmoid(h1)
        hidden = (h1 @ w2 + b2) + hidden
        outs.append(hidden)
    if params["use_zero_linears"]:
        outs = [h @ zw for h, zw in zip(outs, params["zero_linears"])]
    return outs


# ----------------------------------------------------------------------------
# Deterministic parameter construction (shapes per ControlMLPAdapter.__init__)
# Biases / gamma / beta are pre-shaped to (1, N).  Stored in f32 (like the
# torch module); the forward casts matmul weights to the compute dtype.
# ----------------------------------------------------------------------------
def make_params(key, *, num_layers, hidden_size, in_channels, patch_size,
                text_hidden_size, use_zero_linears):
    ks = list(jax.random.split(key, 4 + 4 * num_layers))

    def nrm(k, shape, scale=0.05):
        return (scale * jax.random.normal(k, shape)).astype(jnp.float32)

    params = dict(
        patch_size=patch_size,
        hidden_size=hidden_size,
        use_zero_linears=use_zero_linears,
        # Conv2d(in_channels, hidden, k=p, s=p) flattened to (C*p*p, hidden)
        proj_w=nrm(ks[0], (in_channels * patch_size * patch_size, hidden_size)),
        proj_b=nrm(ks[1], (1, hidden_size)),
        # text_proj: Linear(text_hidden, hidden)
        text_w=nrm(ks[2], (text_hidden_size, hidden_size)),
        text_b=nrm(ks[3], (1, hidden_size)),
        zero_bias=jnp.zeros((1, hidden_size), jnp.float32),
    )
    adapters = []
    for i in range(num_layers):
        base = 4 + 4 * i
        gamma = jnp.ones((1, hidden_size), jnp.float32)   # LayerNorm init
        beta = jnp.zeros((1, hidden_size), jnp.float32)
        w1 = nrm(ks[base + 0], (hidden_size, 2 * hidden_size))
        b1 = nrm(ks[base + 1], (1, 2 * hidden_size))
        w2 = nrm(ks[base + 2], (2 * hidden_size, hidden_size))
        b2 = nrm(ks[base + 3], (1, hidden_size))
        adapters.append((gamma, beta, w1, b1, w2, b2))
    params["adapters"] = adapters
    # zero_module(...) -> zero-initialized weights, bias=False
    params["zero_linears"] = [jnp.zeros((hidden_size, hidden_size), jnp.float32)
                              for _ in range(num_layers)]
    return params


if __name__ == "__main__":
    # Small shapes: B=2, T=2, C=4, H=W=16, patch=2, hidden=32, text_len=8,
    # text_hidden=16, num_layers=2.
    B, T, C, H, W = 2, 2, 4, 16, 16
    patch_size = 2
    hidden_size = 32
    text_len, text_hidden = 8, 16
    num_layers = 2

    key = jax.random.PRNGKey(0)
    kx, kctx, kp, kz = jax.random.split(key, 4)
    x = jax.random.normal(kx, (B, T, C, H, W), jnp.float32)
    context = jax.random.normal(kctx, (B, text_len, text_hidden), jnp.float32)

    # ---- Path 1: no zero_linears, f32 compute (tight numeric check) ----
    params = make_params(kp, num_layers=num_layers, hidden_size=hidden_size,
                         in_channels=C, patch_size=patch_size,
                         text_hidden_size=text_hidden,
                         use_zero_linears=False)
    res = control_mlp_adapter_forward(x, context, params,
                                      compute_dtype=jnp.float32)
    res = [jax.block_until_ready(r) for r in res]
    refs = reference_forward(x, context, params)
    for r, ref in zip(res, refs):
        assert r.shape == ref.shape
        err = float(jnp.max(jnp.abs(r.astype(jnp.float32) - ref)))
        assert jnp.allclose(r.astype(jnp.float32), ref,
                            rtol=1e-3, atol=1e-3), err

    # ---- Path 2: fused zero_linears, bf16 compute (production config) ----
    # zero_module() initializes these weights to zero; substitute random
    # weights here so the fused-kernel numeric check is non-trivial.
    params_z = make_params(kp, num_layers=num_layers, hidden_size=hidden_size,
                           in_channels=C, patch_size=patch_size,
                           text_hidden_size=text_hidden,
                           use_zero_linears=True)
    params_z["zero_linears"] = [
        (0.05 * jax.random.normal(k, (hidden_size, hidden_size))
         ).astype(jnp.float32)
        for k in jax.random.split(kz, num_layers)]
    res_z = control_mlp_adapter_forward(x, context, params_z,
                                        compute_dtype=jnp.bfloat16)
    res_z = [jax.block_until_ready(r) for r in res_z]
    refs_z = reference_forward(x, context, params_z)
    for r, ref in zip(res_z, refs_z):
        assert r.shape == ref.shape
        err = float(jnp.max(jnp.abs(r.astype(jnp.float32) - ref)))
        assert jnp.allclose(r.astype(jnp.float32), ref,
                            rtol=5e-2, atol=5e-2), err

    print("KERNEL_OK")
</pallas_src>

<mosaic_0001>
module attributes {stable_mosaic.version = 11 : i64} {
  func.func @_linear_kernel_single(%arg0: i32, %arg1: memref<128x16xf32, #tpu.memory_space<vmem>>, %arg2: memref<16x32xf32, #tpu.memory_space<vmem>>, %arg3: memref<1x32xf32, #tpu.memory_space<vmem>>, %arg4: memref<128x32xf32, #tpu.memory_space<vmem>>) attributes {dimension_semantics = [#tpu.dimension_semantics<parallel>], iteration_bounds = array<i64: 2>, scalar_prefetch = 0 : i64, scratch_operands = 0 : i64, tpu.core_type = #tpu.core_type<tc>, window_params = [{transform_indices = @transform_0, window_bounds = array<i64: 128, 16>}, {pipeline_mode = #tpu.pipeline_mode<synchronous>, transform_indices = @transform_1, window_bounds = array<i64: 16, 32>}, {pipeline_mode = #tpu.pipeline_mode<synchronous>, transform_indices = @transform_2, window_bounds = array<i64: 1, 32>}, {transform_indices = @transform_3, window_bounds = array<i64: 128, 32>}]} {
    %c0 = arith.constant 0 : index
    %c0_0 = arith.constant 0 : index
    %0 = vector.load %arg1[%c0, %c0_0] : memref<128x16xf32, #tpu.memory_space<vmem>>, vector<128x16xf32>
    %c0_1 = arith.constant 0 : index
    %c0_2 = arith.constant 0 : index
    %1 = vector.load %arg2[%c0_1, %c0_2] : memref<16x32xf32, #tpu.memory_space<vmem>>, vector<16x32xf32>
    %cst = arith.constant dense<0.000000e+00> : vector<128x32xf32>
    %2 = tpu.matmul %0, %1, %cst {dimension_numbers = #tpu.dot_dimension_numbers<[1], [0], [0], [1], [0, 0, 1, 1], [], []>} : vector<128x16xf32>, vector<16x32xf32>, vector<128x32xf32> -> vector<128x32xf32>
    %c0_3 = arith.constant 0 : index
    %c0_4 = arith.constant 0 : index
    %3 = vector.load %arg3[%c0_3, %c0_4] : memref<1x32xf32, #tpu.memory_space<vmem>>, vector<1x32xf32>
    %4 = vector.broadcast %3 : vector<1x32xf32> to vector<128x32xf32>
    %5 = arith.addf %2, %4 : vector<128x32xf32>
    %c0_5 = arith.constant 0 : index
    %c0_6 = arith.constant 0 : index
    %6 = vector.load %arg4[%c0_5, %c0_6] : memref<128x32xf32, #tpu.memory_space<vmem>>, vector<128x32xf32>
    tpu.vector_store %arg4[%c0_5, %c0_6], %5 {strides = array<i32>} : memref<128x32xf32, #tpu.memory_space<vmem>>, vector<128x32xf32>,
    return
  }
  func.func @transform_0(%arg0: i32) -> (i32, i32) {
    %c0_i32 = arith.constant 0 : i32
    %c0_i32_0 = arith.constant 0 : i32
    return %arg0, %c0_i32 : i32, i32
  }
  func.func @transform_1(%arg0: i32) -> (i32, i32) {
    %c0_i32 = arith.constant 0 : i32
    %c0_i32_0 = arith.constant 0 : i32
    %c0_i32_1 = arith.constant 0 : i32
    return %c0_i32, %c0_i32_0 : i32, i32
  }
  func.func @transform_2(%arg0: i32) -> (i32, i32) {
    %c0_i32 = arith.constant 0 : i32
    %c0_i32_0 = arith.constant 0 : i32
    %c0_i32_1 = arith.constant 0 : i32
    return %c0_i32, %c0_i32_0 : i32, i32
  }
  func.func @transform_3(%arg0: i32) -> (i32, i32) {
    %c0_i32 = arith.constant 0 : i32
    %c0_i32_0 = arith.constant 0 : i32
    return %arg0, %c0_i32 : i32, i32
  }
}

</mosaic_0001>

<llo_original>
// kernel: tpu_custom_call.1
$region0: #{tpu_custom_call.1}
  #allocation0 [shape = 'u32[]', space=smem, size = 0x4, offset = 0x4, fixed_abs, tag = 'smem constant byte address 0x4 - core index']
  #allocation1 [shape = 'u32[144,128]{1,0:T(1,128)}', space=vmem, size = 0x12000, scoped, tag = 'internal scratch']
  %s0 = inlined_call_operand.vmem [shape: f32[256,16], index: 0, kind: input, shape index: {}]
  %s1 = inlined_call_operand.vmem [shape: f32[16,32], index: 1, kind: input, shape index: {}]
  %s2 = inlined_call_operand.vmem [shape: f32[1,32], index: 2, kind: input, shape index: {}]
  %s3 = inlined_call_operand.vmem [shape: f32[256,32], index: 3, kind: output, shape index: {}]
  %s4 = sld [smem:[#allocation0]]
  $region45: #{tpu_custom_call.1} parent=0
    _
  %s6 = ssub.s32 1, %s4
  %s7 = scalar_select 0, %s6, %s4
  loop: start=0, step=1, limit=4
  $region2: #{tpu_custom_call.1} parent=0 // loop_pre_header
    _
  $region3: #{tpu_custom_call.1} parent=0 // loop_header
    %s9 = sphi 0, %s13
    %p10 = scmp.ge.s32.totalorder %s9, 4
    %s19 = sphi 0, %s21
    %s22 = sphi 0, %s19
    %s23 = sphi 0, %s22
    %s39 = sphi 0, %s23
    %s43 = sphi 0, %s43
    %s45 = sphi 0, %s43
    %s46 = sphi 0, %s45
    %s60 = sphi 0, %s46
    %s64 = sphi 0, %s64
    %s66 = sphi 0, %s64
    %s67 = sphi 0, %s66
    %s81 = sphi 0, %s67
    %s87 = sphi 0, %s89
    %s90 = sphi 0, %s87
    %s91 = sphi 0, %s90
    %s107 = sphi 0, %s91
  $region4: #{tpu_custom_call.1} parent=0 // loop_header_branch
    %12 = sbr.rel (%p10) target = $region8
  $region5: #{tpu_custom_call.1} parent=0 // loop_body
    %s14 = ssub.s32 %s9, 1
    %s15 = ssub.s32 %s9, 2
    %s16 = sadd.s32 %s9, 1
    %s17 = ssub.s32 %s9, %s16
    %p18 = scmp.eq.s32.totalorder %s17, 0
    %s20 = sadd.s32 %s19, 1
    %s21 = scalar_select %p18, %s19, %s20
    %p24 = pneg %p18
    %p25 = scmp.eq.s32.totalorder %s9, 1
    %p26 = por %p24, %p25
    %p27 = scmp.ne.s32.totalorder %s19, %s22
    %p28 = scmp.eq.s32.totalorder %s9, 0
    %p29 = por %p27, %p28
    %p30 = scmp.ne.s32.totalorder %s19, %s22
    %p31 = scmp.eq.s32.totalorder %s14, 1
    %p32 = por %p30, %p31
    %p33 = scmp.ne.s32.totalorder %s22, %s23
    %p34 = scmp.eq.s32.totalorder %s14, 0
    %p35 = por %p33, %p34
    %p36 = scmp.ne.s32.totalorder %s22, %s23
    %p37 = scmp.eq.s32.totalorder %s15, 1
    %p38 = por %p36, %p37
    %p40 = scmp.ne.s32.totalorder %s23, %s39
    %p41 = scmp.eq.s32.totalorder %s15, 0
    %p42 = por %p40, %p41
    %s44 = sadd.s32 %s43, 1
    %p47 = scmp.eq.s32.totalorder %s9, 1
    %p48 = scmp.ne.s32.totalorder %s43, %s45
    %p49 = scmp.eq.s32.totalorder %s9, 0
    %p50 = por %p48, %p49
    %p51 = scmp.ne.s32.totalorder %s43, %s45
    %p52 = scmp.eq.s32.totalorder %s14, 1
    %p53 = por %p51, %p52
    %p54 = scmp.ne.s32.totalorder %s45, %s46
    %p55 = scmp.eq.s32.totalorder %s14, 0
    %p56 = por %p54, %p55
    %p57 = scmp.ne.s32.totalorder %s45, %s46
    %p58 = scmp.eq.s32.totalorder %s15, 1
    %p59 = por %p57, %p58
    %p61 = scmp.ne.s32.totalorder %s46, %s60
    %p62 = scmp.eq.s32.totalorder %s15, 0
    %p63 = por %p61, %p62
    %s65 = sadd.s32 %s64, 1
    %p68 = scmp.eq.s32.totalorder %s9, 1
    %p69 = scmp.ne.s32.totalorder %s64, %s66
    %p70 = scmp.eq.s32.totalorder %s9, 0
    %p71 = por %p69, %p70
    %p72 = scmp.ne.s32.totalorder %s64, %s66
    %p73 = scmp.eq.s32.totalorder %s14, 1
    %p74 = por %p72, %p73
    %p75 = scmp.ne.s32.totalorder %s66, %s67
    %p76 = scmp.eq.s32.totalorder %s14, 0
    %p77 = por %p75, %p76
    %p78 = scmp.ne.s32.totalorder %s66, %s67
    %p79 = scmp.eq.s32.totalorder %s15, 1
    %p80 = por %p78, %p79
    %p82 = scmp.ne.s32.totalorder %s67, %s81
    %p83 = scmp.eq.s32.totalorder %s15, 0
    %p84 = por %p82, %p83
    %s85 = ssub.s32 %s9, %s16
    %p86 = scmp.eq.s32.totalorder %s85, 0
    %s88 = sadd.s32 %s87, 1
    %s89 = scalar_select %p86, %s87, %s88
    %p92 = pneg %p86
    %p93 = scmp.eq.s32.totalorder %s9, 1
    %p94 = por %p92, %p93
    %p95 = scmp.ne.s32.totalorder %s87, %s90
    %p96 = scmp.eq.s32.totalorder %s9, 0
    %p97 = por %p95, %p96
    %p98 = scmp.ne.s32.totalorder %s87, %s90
    %p99 = scmp.eq.s32.totalorder %s14, 1
    %p100 = por %p98, %p99
    %p101 = scmp.ne.s32.totalorder %s90, %s91
    %p102 = scmp.eq.s32.totalorder %s14, 0
    %p103 = por %p101, %p102
    %p104 = scmp.ne.s32.totalorder %s90, %s91
    %p105 = scmp.eq.s32.totalorder %s15, 1
    %p106 = por %p104, %p105
    %p108 = scmp.ne.s32.totalorder %s91, %s107
    %p109 = scmp.eq.s32.totalorder %s15, 0
    %p110 = por %p108, %p109
    %p111 = scmp.le.s32.totalorder 1, %s9
    %p112 = scmp.lt.s32.totalorder %s9, 3
    %p113 = pnand %p111, %p112
    %p114 = pneg %p113
    // Predicated region
    $region9: #{tpu_custom_call.1} parent=5 // pred_check
      _
    $region10: #{tpu_custom_call.1} parent=5 // pred_check_branch
      %116 = sbr.rel (%p113) target = $region12
    $region11: #{tpu_custom_call.1} parent=5 // pred_region
      %s117 = ssub.s32 %s9, 1
      // Predicated region
      $region13: #{tpu_custom_call.1} parent=11 // pred_check
        %p118 = pneg %p56
      $region14: #{tpu_custom_call.1} parent=11 // pred_check_branch
        %120 = sbr.rel (%p118) target = $region16
      $region15: #{tpu_custom_call.1} parent=11 // pred_region
        _
      $region16: #{tpu_custom_call.1} parent=11 // pred_fallthru
        _
      // Predicated region
      $region17: #{tpu_custom_call.1} parent=11 // pred_check
        %p121 = pneg %p77
      $region18: #{tpu_custom_call.1} parent=11 // pred_check_branch
        %123 = sbr.rel (%p121) target = $region20
      $region19: #{tpu_custom_call.1} parent=11 // pred_region
        _
      $region20: #{tpu_custom_call.1} parent=11 // pred_fallthru
        _
    $region12: #{tpu_custom_call.1} parent=5 // pred_fallthru
      _
    %p124 = scmp.lt.s32.totalorder %s9, 2
    // Predicated region
    $region21: #{tpu_custom_call.1} parent=5 // pred_check
      %p125 = pneg %p124
    $region22: #{tpu_custom_call.1} parent=5 // pred_check_branch
      %127 = sbr.rel (%p125) target = $region24
    $region23: #{tpu_custom_call.1} parent=5 // pred_region
      // Predicated region
      $region25: #{tpu_custom_call.1} parent=23 // pred_check
        %p128 = pneg %p29
      $region26: #{tpu_custom_call.1} parent=23 // pred_check_branch
        %130 = sbr.rel (%p128) target = $region28
      $region27: #{tpu_custom_call.1} parent=23 // pred_region
        %s131 = smul.u32 16, %s9
        %p132 = scmp.lt.s32.totalorder %s131, 31
        %s133 = scalar_select %p132, %s131, 31
        %s134 = smul.addr %s133, 8
        %s135 = scalar_lea.vmem %s0, %s134
        %s136 = smul.u32 16, %s9
      $region28: #{tpu_custom_call.1} parent=23 // pred_fallthru
        _
    $region24: #{tpu_custom_call.1} parent=5 // pred_fallthru
      _
    %p137 = scmp.le.s32.totalorder 1, %s9
    %p138 = scmp.lt.s32.totalorder %s9, 3
    %p139 = pnand %p137, %p138
    %p140 = pneg %p139
    // Predicated region
    $region29: #{tpu_custom_call.1} parent=5 // pred_check
      _
    $region30: #{tpu_custom_call.1} parent=5 // pred_check_branch
      %142 = sbr.rel (%p139) target = $region32
    $region31: #{tpu_custom_call.1} parent=5 // pred_region
      %s143 = ssub.s32 %s9, 1
      %s144 = smul.u32 16, %s14
      %p145 = scmp.lt.s32.totalorder %s144, 31
      %s146 = scalar_select %p145, %s144, 31
      %s147 = smul.addr %s146, 8
      %s148 = scalar_lea.vmem %s0, %s147
      %p149 = pneg %p35
      %p150 = pneg %p32
      %p151 = pneg %p56
      %p152 = pneg %p53
      %p153 = pneg %p77
      %p154 = pneg %p74
      %p155 = pneg %p103
      %p156 = pneg %p100
      %s157 = smul.u32 16, %s14
      %p158 = scmp.lt.s32.totalorder %s157, 31
      %s159 = scalar_select %p158, %s157, 31
      %s160 = smul.addr %s159, 8
      %s161 = scalar_lea.vmem %s3, %s160
      %s162 = smul.u32 16, %s14
      %p163 = scmp.lt.s32.totalorder %s162, 31
      %s164 = scalar_select %p163, %s162, 31
      %s165 = smul.addr %s164, 8
      %s166 = scalar_lea.vmem %s0, %s165
      %s167 = smul.u32 16, %s14
      %s168 = smul.u32 16, %s14
      %p169 = scmp.lt.s32.totalorder %s168, 31
      %s170 = scalar_select %p169, %s168, 31
      %s171 = smul.addr %s170, 8
      %s172 = scalar_lea.vmem %s3, %s171
      %s173 = smul.u32 16, %s14
      %v174 = vld [vmem:[%s166] sm:$0xff]
      %v175 = vld [vmem:[%s166 + $0x8] sm:$0xff]
      %v176 = vld [vmem:[%s166 + $0x10] sm:$0xff]
      %v177 = vld [vmem:[%s166 + $0x18] sm:$0xff]
      %v178 = vld [vmem:[%s166 + $0x20] sm:$0xff]
      %v179 = vld [vmem:[%s166 + $0x28] sm:$0xff]
      %v180 = vld [vmem:[%s166 + $0x30] sm:$0xff]
      %v181 = vld [vmem:[%s166 + $0x38] sm:$0xff]
      %v182 = vld [vmem:[%s166 + $0x40] sm:$0xff]
      %v183 = vld [vmem:[%s166 + $0x48] sm:$0xff]
      %v184 = vld [vmem:[%s166 + $0x50] sm:$0xff]
      %v185 = vld [vmem:[%s166 + $0x58] sm:$0xff]
      %v186 = vld [vmem:[%s166 + $0x60] sm:$0xff]
      %v187 = vld [vmem:[%s166 + $0x68] sm:$0xff]
      %v188 = vld [vmem:[%s166 + $0x70] sm:$0xff]
      %v189 = vld [vmem:[%s166 + $0x78] sm:$0xff]
      %v190 = vld [vmem:[%s1] sm:$0xff]
      %v191 = vld [vmem:[%s1 + $0x8] sm:$0xff]
      %v192 = vld [vmem:[%s2] sm:$0x1]
      %v194 = vlaneseq
      %v195 = vshrl.u32 %v194, 7
      %v196 = vsub.s32 0, %v195
      %v197 = vrot.slane %v192, %v196
      %vm199 = vcmask 130048
      %v201 = vsel %vm199, %v174, 0
      %v204 = vsel %vm199, %v175, 0
      %v207 = vsel %vm199, %v176, 0
      %v210 = vsel %vm199, %v177, 0
      %v213 = vsel %vm199, %v178, 0
      %v216 = vsel %vm199, %v179, 0
      %v219 = vsel %vm199, %v180, 0
      %v222 = vsel %vm199, %v181, 0
      %v225 = vsel %vm199, %v182, 0
      %v228 = vsel %vm199, %v183, 0
      %v231 = vsel %vm199, %v184, 0
      %v234 = vsel %vm199, %v185, 0
      %v237 = vsel %vm199, %v186, 0
      %v240 = vsel %vm199, %v187, 0
      %v243 = vsel %vm199, %v188, 0
      %v246 = vsel %vm199, %v189, 0
      %248 = vmatprep.subr.mxu0 0.0
      %249 = vmatpush1.msra.mxu0 %v190
      %250 = vmatprep.subr.mxu0 0.0
      %251 = vmatpush1.msra.mxu0 %v191
      %252 = vmatprep.subr.mxu0 0.0
      %253 = vmatpush1.msra.mxu0 0.0
      %254 = vmatprep.subr.mxu0 0.0
      %255 = vmatpush1.msra.mxu0 0.0
      %256 = vmatprep.subr.mxu0 0.0
      %257 = vmatpush1.msra.mxu0 0.0
      %258 = vmatprep.subr.mxu0 0.0
      %259 = vmatpush1.msra.mxu0 0.0
      %260 = vmatprep.subr.mxu0 0.0
      %261 = vmatpush1.msra.mxu0 0.0
      %262 = vmatprep.subr.mxu0 0.0
      %263 = vmatpush1.msra.mxu0 0.0
      %264 = vmatprep.subr.mxu0 0.0
      %265 = vmatpush1.msra.mxu0 0.0
      %266 = vmatprep.subr.mxu0 0.0
      %267 = vmatpush1.msra.mxu0 0.0
      %268 = vmatprep.subr.mxu0 0.0
      %269 = vmatpush1.msra.mxu0 0.0
      %270 = vmatprep.subr.mxu0 0.0
      %271 = vmatpush1.msra.mxu0 0.0
      %272 = vmatprep.subr.mxu0 0.0
      %273 = vmatpush1.msra.mxu0 0.0
      %274 = vmatprep.subr.mxu0 0.0
      %275 = vmatpush1.msra.mxu0 0.0
      %276 = vmatprep.subr.mxu0 0.0
      %277 = vmatpush1.msra.mxu0 0.0
      %278 = vmatprep.subr.mxu0 0.0
      %279 = vmatpush1.msra.mxu0 0.0
      %280 = vmatprep.subr.mxu0 0.0
      %281 = vmatpush1.msra.mxu0 0.0
      %282 = vmatprep.subr.mxu0 0.0
      %283 = vmatpush1.msra.mxu0 0.0
      %284 = vmatprep.subr.mxu0 0.0
      %285 = vmatpush1.msra.mxu0 0.0
      %286 = vmatprep.subr.mxu0 0.0
      %287 = vmatpush1.msra.mxu0 0.0
      %288 = vmatprep.subr.mxu0 0.0
      %289 = vmatpush1.msra.mxu0 0.0
      %290 = vmatprep.subr.mxu0 0.0
      %291 = vmatpush1.msra.mxu0 0.0
      %292 = vmatprep.subr.mxu0 0.0
      %293 = vmatpush1.msra.mxu0 0.0
      %294 = vmatprep.subr.mxu0 0.0
      %295 = vmatpush1.msra.mxu0 0.0
      %296 = vmatprep.subr.mxu0 0.0
      %297 = vmatpush1.msra.mxu0 0.0
      %298 = vmatprep.subr.mxu0 0.0
      %299 = vmatpush1.msra.mxu0 0.0
      %300 = vmatprep.subr.mxu0 0.0
      %301 = vmatpush1.msra.mxu0 0.0
      %302 = vmatprep.subr.mxu0 0.0
      %303 = vmatpush1.msra.mxu0 0.0
      %304 = vmatprep.subr.mxu0 0.0
      %305 = vmatpush1.msra.mxu0 0.0
      %306 = vmatprep.subr.mxu0 0.0
      %307 = vmatpush1.msra.mxu0 0.0
      %308 = vmatprep.subr.mxu0 0.0
      %309 = vmatpush1.msra.mxu0 0.0
      %310 = vmatprep.subr.mxu0 0.0
      %311 = vmatpush1.msra.mxu0 0.0
      %312 = vmatprep.mubr.f32.mxu0 0.0
      %313 = vmatmul.mubr.f32.gmra.mrb[0].mxu0 %v201
      %v314 = vpop.f32.mrb[0].mxu0
      %v315 = vadd.f32 %v197, %v314
      %v316 = vpop.f32.mrb[0].mxu0
      %317 = vmatprep.mubr.f32.mxu0 0.0
      %318 = vmatmul.mubr.f32.gmra.mrb[0].mxu0 %v204
      %v319 = vpop.f32.mrb[0].mxu0
      %v320 = vadd.f32 %v197, %v319
      %v321 = vpop.f32.mrb[0].mxu0
      %322 = vmatprep.mubr.f32.mxu0 0.0
      %323 = vmatmul.mubr.f32.gmra.mrb[0].mxu0 %v207
      %v324 = vpop.f32.mrb[0].mxu0
      %v325 = vadd.f32 %v197, %v324
      %v326 = vpop.f32.mrb[0].mxu0
      %327 = vmatprep.mubr.f32.mxu0 0.0
      %328 = vmatmul.mubr.f32.gmra.mrb[0].mxu0 %v210
      %v329 = vpop.f32.mrb[0].mxu0
      %v330 = vadd.f32 %v197, %v329
      %v331 = vpop.f32.mrb[0].mxu0
      %332 = vmatprep.mubr.f32.mxu0 0.0
      %333 = vmatmul.mubr.f32.gmra.mrb[0].mxu0 %v213
      %v334 = vpop.f32.mrb[0].mxu0
      %v335 = vadd.f32 %v197, %v334
      %v336 = vpop.f32.mrb[0].mxu0
      %337 = vmatprep.mubr.f32.mxu0 0.0
      %338 = vmatmul.mubr.f32.gmra.mrb[0].mxu0 %v216
      %v339 = vpop.f32.mrb[0].mxu0
      %v340 = vadd.f32 %v197, %v339
      %v341 = vpop.f32.mrb[0].mxu0
      %342 = vmatprep.mubr.f32.mxu0 0.0
      %343 = vmatmul.mubr.f32.gmra.mrb[0].mxu0 %v219
      %v344 = vpop.f32.mrb[0].mxu0
      %v345 = vadd.f32 %v197, %v344
      %v346 = vpop.f32.mrb[0].mxu0
      %347 = vmatprep.mubr.f32.mxu0 0.0
      %348 = vmatmul.mubr.f32.gmra.mrb[0].mxu0 %v222
      %v349 = vpop.f32.mrb[0].mxu0
      %v350 = vadd.f32 %v197, %v349
      %v351 = vpop.f32.mrb[0].mxu0
      %352 = vmatprep.mubr.f32.mxu0 0.0
      %353 = vmatmul.mubr.f32.gmra.mrb[0].mxu0 %v225
      %v354 = vpop.f32.mrb[0].mxu0
      %v355 = vadd.f32 %v197, %v354
      %v356 = vpop.f32.mrb[0].mxu0
      %357 = vmatprep.mubr.f32.mxu0 0.0
      %358 = vmatmul.mubr.f32.gmra.mrb[0].mxu0 %v228
      %v359 = vpop.f32.mrb[0].mxu0
      %v360 = vadd.f32 %v197, %v359
      %v361 = vpop.f32.mrb[0].mxu0
      %362 = vmatprep.mubr.f32.mxu0 0.0
      %363 = vmatmul.mubr.f32.gmra.mrb[0].mxu0 %v231
      %v364 = vpop.f32.mrb[0].mxu0
      %v365 = vadd.f32 %v197, %v364
      %v366 = vpop.f32.mrb[0].mxu0
      %367 = vmatprep.mubr.f32.mxu0 0.0
      %368 = vmatmul.mubr.f32.gmra.mrb[0].mxu0 %v234
      %v369 = vpop.f32.mrb[0].mxu0
      %v370 = vadd.f32 %v197, %v369
      %v371 = vpop.f32.mrb[0].mxu0
      %372 = vmatprep.mubr.f32.mxu0 0.0
      %373 = vmatmul.mubr.f32.gmra.mrb[0].mxu0 %v237
      %v374 = vpop.f32.mrb[0].mxu0
      %v375 = vadd.f32 %v197, %v374
      %v376 = vpop.f32.mrb[0].mxu0
      %377 = vmatprep.mubr.f32.mxu0 0.0
      %378 = vmatmul.mubr.f32.gmra.mrb[0].mxu0 %v240
      %v379 = vpop.f32.mrb[0].mxu0
      %v380 = vadd.f32 %v197, %v379
      %v381 = vpop.f32.mrb[0].mxu0
      %382 = vmatprep.mubr.f32.mxu0 0.0
      %383 = vmatmul.mubr.f32.gmra.mrb[0].mxu0 %v243
      %v384 = vpop.f32.mrb[0].mxu0
      %v385 = vadd.f32 %v197, %v384
      %v386 = vpop.f32.mrb[0].mxu0
      %387 = vmatprep.mubr.f32.mxu0 0.0
      %388 = vmatmul.mubr.f32.gmra.mrb[0].mxu0 %v246
      %v389 = vpop.f32.mrb[0].mxu0
      %v390 = vadd.f32 %v197, %v389
      %v391 = vpop.f32.mrb[0].mxu0
      %392 = vdwg.mxu0
      %vm393 = vcmask 261120
      %394 = vst.msk [vmem:[%s172] sm:$0xff] %vm393, %v315
      %395 = vst.msk [vmem:[%s172 + $0x8] sm:$0xff] %vm393, %v320
      %396 = vst.msk [vmem:[%s172 + $0x10] sm:$0xff] %vm393, %v325
      %397 = vst.msk [vmem:[%s172 + $0x18] sm:$0xff] %vm393, %v330
      %398 = vst.msk [vmem:[%s172 + $0x20] sm:$0xff] %vm393, %v335
      %399 = vst.msk [vmem:[%s172 + $0x28] sm:$0xff] %vm393, %v340
      %400 = vst.msk [vmem:[%s172 + $0x30] sm:$0xff] %vm393, %v345
      %401 = vst.msk [vmem:[%s172 + $0x38] sm:$0xff] %vm393, %v350
      %402 = vst.msk [vmem:[%s172 + $0x40] sm:$0xff] %vm393, %v355
      %403 = vst.msk [vmem:[%s172 + $0x48] sm:$0xff] %vm393, %v360
      %404 = vst.msk [vmem:[%s172 + $0x50] sm:$0xff] %vm393, %v365
      %405 = vst.msk [vmem:[%s172 + $0x58] sm:$0xff] %vm393, %v370
      %406 = vst.msk [vmem:[%s172 + $0x60] sm:$0xff] %vm393, %v375
      %407 = vst.msk [vmem:[%s172 + $0x68] sm:$0xff] %vm393, %v380
      %408 = vst.msk [vmem:[%s172 + $0x70] sm:$0xff] %vm393, %v385
      %409 = vst.msk [vmem:[%s172 + $0x78] sm:$0xff] %vm393, %v390
      %s410 = smul.u32 16, %s14
      %p411 = scmp.lt.s32.totalorder %s410, 31
      %s412 = scalar_select %p411, %s410, 31
      %s413 = smul.addr %s412, 8
      %s414 = scalar_lea.vmem %s3, %s413
      // Predicated region
      $region33: #{tpu_custom_call.1} parent=31 // pred_check
        %p415 = pneg %p100
      $region34: #{tpu_custom_call.1} parent=31 // pred_check_branch
        %417 = sbr.rel (%p415) target = $region36
      $region35: #{tpu_custom_call.1} parent=31 // pred_region
        %s418 = smul.u32 16, %s14
      $region36: #{tpu_custom_call.1} parent=31 // pred_fallthru
        _
    $region32: #{tpu_custom_call.1} parent=5 // pred_fallthru
      _
    %p419 = scmp.le.s32.totalorder 2, %s9
    // Predicated region
    $region37: #{tpu_custom_call.1} parent=5 // pred_check
      %p420 = pneg %p419
    $region38: #{tpu_custom_call.1} parent=5 // pred_check_branch
      %422 = sbr.rel (%p420) target = $region40
    $region39: #{tpu_custom_call.1} parent=5 // pred_region
      %s423 = ssub.s32 %s9, 2
      // Predicated region
      $region41: #{tpu_custom_call.1} parent=39 // pred_check
        %p424 = pneg %p106
      $region42: #{tpu_custom_call.1} parent=39 // pred_check_branch
        %426 = sbr.rel (%p424) target = $region44
      $region43: #{tpu_custom_call.1} parent=39 // pred_region
        %s427 = smul.u32 16, %s15
        %p428 = scmp.lt.s32.totalorder %s427, 31
        %s429 = scalar_select %p428, %s427, 31
        %s430 = smul.addr %s429, 8
        %s431 = scalar_lea.vmem %s3, %s430
      $region44: #{tpu_custom_call.1} parent=39 // pred_fallthru
        _
    $region40: #{tpu_custom_call.1} parent=5 // pred_fallthru
      _
  $region6: #{tpu_custom_call.1} parent=0 // loop_footer
    %s13 = sadd.s32 1, %s9
  $region7: #{tpu_custom_call.1} parent=0 // loop_footer_branch
    %8 = sbr.rel target = $region3
  $region8: #{tpu_custom_call.1} parent=0 // loop_exit
    _

</llo_original>
